<compile_context>
chip_gen: v7x
topology: tpu7x:2x2x1
jax: 0.10.0
libtpu: 0.0.40
codegen_flags: <defaults>
</compile_context>

<pallas_src>
import jax
import jax.numpy as jnp
from jax.experimental import pallas as pl
from jax.experimental.pallas import tpu as pltpu

_LANE = 128
_MAX_TILE_M = 32768          # (8, 32768) f32 tile = 1 MiB; 2x-buffered in+out ~4 MiB
_PALLAS_MIN_PIXELS = 2048    # below this, a single fused XLA op beats any launch


def _round_up(v, m):
    return (v + m - 1) // m * m


def _conv1x1_kernel(x_ref, w_ref, o_ref):
    # x_ref: (Cin, TILE_M)  channel-major input pixels
    # w_ref: (Cout, Cin)    1x1-conv weights
    # o_ref: (Cout, TILE_M) conv output (bias + border handled in the wrapper)
    o_ref[...] = jnp.dot(w_ref[...], x_ref[...],
                         preferred_element_type=jnp.float32)


def _conv1x1_pallas(x_nchw, w2):
    N, Cin, H, W = x_nchw.shape
    Cout = w2.shape[0]
    M = H * W

    # free, contiguous per-batch channel-major view (no HBM transpose)
    x_cm = x_nchw.reshape(N, Cin, M)

    # lane-dense tile: big enough to amortize per-step overhead, small enough
    # to keep >=4 grid steps for moderate M and stay well inside VMEM.
    tile_m = min(_MAX_TILE_M, max(_LANE, _round_up(pl.cdiv(M, 4), _LANE)))
    grid = (N, pl.cdiv(M, tile_m))

    y = pl.pallas_call(
        _conv1x1_kernel,
        out_shape=jax.ShapeDtypeStruct((N, Cout, M), jnp.float32),
        grid=grid,
        in_specs=[
            # full-dim Cin (=3) second-to-last block dim: no channel padding
            pl.BlockSpec((None, Cin, tile_m), lambda n, i: (n, 0, i)),
            # tiny resident weight tile (full-dim on both axes)
            pl.BlockSpec((Cout, Cin), lambda n, i: (0, 0)),
        ],
        # exactly Cout (=6) output rows: no padded rows, no slice afterwards
        out_specs=pl.BlockSpec((None, Cout, tile_m), lambda n, i: (n, 0, i)),
        compiler_params=pltpu.CompilerParams(
            dimension_semantics=("parallel", "parallel")),
    )(x_cm, w2)

    return y.reshape(N, Cout, H, W)


def _forward(x1, x2, weight, bias):
    N, Cin, H, W = x1.shape
    Cout = weight.shape[0]
    # real PyTorch Conv2d weight is (Cout, Cin, 1, 1); also accept (Cout, Cin)
    w2 = weight.reshape(Cout, Cin)

    if N * H * W < _PALLAS_MIN_PIXELS:
        # tiny problem: one fused XLA op beats the pallas_call launch overhead
        y = jnp.einsum('nchw,oc->nohw', x1, w2)
    else:
        y = _conv1x1_pallas(x1, w2)

    # Epilogue (single fused XLA op): the padding=1 border of a zero-padded
    # 1x1 conv is exactly `bias`, so border fill and bias add are one op.
    v1 = jnp.pad(y, ((0, 0), (0, 0), (1, 1), (1, 1))) \
        + bias[None, :, None, None]

    # TODO(synk): the original module's `v2 = v1 - v2` reads v2 before it is
    # bound (UnboundLocalError in PyTorch); we treat the missing operand as
    # zeros, so v2 is simply v1 (JAX arrays are immutable, aliasing is safe).
    v2 = v1
    return v2, x2, v1


conv1x1_pad1_forward = jax.jit(_forward)


if __name__ == "__main__":
    key = jax.random.PRNGKey(0)
    k1, k2, kw, kb = jax.random.split(key, 4)

    # shapes from the original module spec (small): x1 (1,3,64,64), x2 (1,5,32,32)
    x1 = jax.random.normal(k1, (1, 3, 64, 64), dtype=jnp.float32)
    x2 = jax.random.normal(k2, (1, 5, 32, 32), dtype=jnp.float32)

    Cout, Cin = 6, 3
    weight = jax.random.normal(kw, (Cout, Cin, 1, 1), dtype=jnp.float32) * 0.1
    bias = jax.random.normal(kb, (Cout,), dtype=jnp.float32) * 0.1

    v2, x2_out, v1 = conv1x1_pad1_forward(x1, x2, weight, bias)
    jax.block_until_ready((v2, x2_out, v1))

    assert v1.shape == (1, 6, 66, 66), v1.shape
    assert v2.shape == (1, 6, 66, 66), v2.shape
    assert x2_out.shape == (1, 5, 32, 32), x2_out.shape

    # reference: zero-pad then 1x1 conv + bias
    w2 = weight.reshape(Cout, Cin)
    xp = jnp.pad(x1, ((0, 0), (0, 0), (1, 1), (1, 1)))
    ref = jnp.einsum('nchw,oc->nohw', xp, w2) + bias[None, :, None, None]
    assert jnp.allclose(v1, ref, atol=1e-5), "conv mismatch (pallas path)"
    assert jnp.array_equal(v2, v1), "v2 must equal v1 (unbound-v2 interpretation)"
    assert jnp.array_equal(x2_out, x2), "x2 passthrough mismatch"

    # exercise the small-shape XLA fallback path as well
    x1s = jax.random.normal(k1, (2, 3, 8, 8), dtype=jnp.float32)
    v2s, _, v1s = conv1x1_pad1_forward(x1s, x2, weight, bias)
    jax.block_until_ready(v1s)
    xps = jnp.pad(x1s, ((0, 0), (0, 0), (1, 1), (1, 1)))
    refs = jnp.einsum('nchw,oc->nohw', xps, w2) + bias[None, :, None, None]
    assert jnp.allclose(v1s, refs, atol=1e-5), "conv mismatch (fallback path)"

    print("KERNEL_OK")
</pallas_src>

<mosaic_0001>
module attributes {stable_mosaic.version = 11 : i64} {
  func.func @_conv1x1_kernel(%arg0: i32, %arg1: i32, %arg2: memref<1x3x1024xf32, #tpu.memory_space<vmem>>, %arg3: memref<6x3xf32, #tpu.memory_space<vmem>>, %arg4: memref<1x6x1024xf32, #tpu.memory_space<vmem>>) attributes {dimension_semantics = [#tpu.dimension_semantics<parallel>, #tpu.dimension_semantics<parallel>], iteration_bounds = array<i64: 1, 4>, scalar_prefetch = 0 : i64, scratch_operands = 0 : i64, tpu.core_type = #tpu.core_type<tc>, window_params = [{transform_indices = @transform_0, window_bounds = array<i64: 1, 3, 1024>}, {pipeline_mode = #tpu.pipeline_mode<synchronous>, transform_indices = @transform_1, window_bounds = array<i64: 6, 3>}, {transform_indices = @transform_2, window_bounds = array<i64: 1, 6, 1024>}]} {
    %c0 = arith.constant 0 : index
    %c0_0 = arith.constant 0 : index
    %0 = vector.load %arg3[%c0, %c0_0] : memref<6x3xf32, #tpu.memory_space<vmem>>, vector<6x3xf32>
    %c0_1 = arith.constant 0 : index
    %c0_2 = arith.constant 0 : index
    %c0_3 = arith.constant 0 : index
    %1 = vector.load %arg2[%c0_1, %c0_2, %c0_3] : memref<1x3x1024xf32, #tpu.memory_space<vmem>>, vector<1x3x1024xf32>
    %2 = vector.shape_cast %1 : vector<1x3x1024xf32> to vector<3x1024xf32>
    %cst = arith.constant dense<0.000000e+00> : vector<6x1024xf32>
    %3 = tpu.matmul %0, %2, %cst {dimension_numbers = #tpu.dot_dimension_numbers<[1], [0], [0], [1], [0, 0, 1, 1], [], []>} : vector<6x3xf32>, vector<3x1024xf32>, vector<6x1024xf32> -> vector<6x1024xf32>
    %c0_4 = arith.constant 0 : index
    %c0_5 = arith.constant 0 : index
    %c0_6 = arith.constant 0 : index
    %4 = vector.load %arg4[%c0_4, %c0_5, %c0_6] : memref<1x6x1024xf32, #tpu.memory_space<vmem>>, vector<1x6x1024xf32>
    %5 = vector.shape_cast %4 : vector<1x6x1024xf32> to vector<6x1024xf32>
    %6 = vector.shape_cast %3 : vector<6x1024xf32> to vector<1x6x1024xf32>
    tpu.vector_store %arg4[%c0_4, %c0_5, %c0_6], %6 {strides = array<i32>} : memref<1x6x1024xf32, #tpu.memory_space<vmem>>, vector<1x6x1024xf32>,
    return
  }
  func.func @transform_0(%arg0: i32, %arg1: i32) -> (i32, i32, i32) {
    %c0_i32 = arith.constant 0 : i32
    %c0_i32_0 = arith.constant 0 : i32
    return %arg0, %c0_i32, %arg1 : i32, i32, i32
  }
  func.func @transform_1(%arg0: i32, %arg1: i32) -> (i32, i32) {
    %c0_i32 = arith.constant 0 : i32
    %c0_i32_0 = arith.constant 0 : i32
    %c0_i32_1 = arith.constant 0 : i32
    return %c0_i32, %c0_i32_0 : i32, i32
  }
  func.func @transform_2(%arg0: i32, %arg1: i32) -> (i32, i32, i32) {
    %c0_i32 = arith.constant 0 : i32
    %c0_i32_0 = arith.constant 0 : i32
    return %arg0, %c0_i32, %arg1 : i32, i32, i32
  }
}

</mosaic_0001>

<llo_original>
// kernel: _forward.1
$region0: #{_forward.1}
  #allocation0 [shape = 'u32[]', space=smem, size = 0x4, offset = 0x4, fixed_abs, tag = 'smem constant byte address 0x4 - core index']
  #allocation1 [shape = 'u32[144,128]{1,0:T(1,128)}', space=vmem, size = 0x12000, scoped, tag = 'internal scratch']
  %s0 = inlined_call_operand.vmem [shape: f32[1,3,4096], index: 0, kind: input, shape index: {}]
  %s1 = inlined_call_operand.vmem [shape: f32[6,3], index: 1, kind: input, shape index: {}]
  %s2 = inlined_call_operand.vmem [shape: f32[1,6,4096], index: 2, kind: output, shape index: {}]
  %s3 = sld [smem:[#allocation0]]
  $region41: #{_forward.1} parent=0
    _
  %s5 = ssub.s32 1, %s3
  %s6 = scalar_select 0, %s5, %s3
  loop: start=0, step=1, limit=6
  $region2: #{_forward.1} parent=0 // loop_pre_header
    _
  $region3: #{_forward.1} parent=0 // loop_header
    %s8 = sphi 0, %s12
    %p9 = scmp.ge.s32.totalorder %s8, 6
    %s15 = sphi 0, %s27
    %s16 = sphi 0, %s23
    %s17 = sphi 0, %s15
    %s18 = sphi 0, %s16
    %s19 = sphi 0, %s17
    %s20 = sphi 0, %s18
    %s32 = sphi 0, %s34
    %s35 = sphi 0, %s32
    %s36 = sphi 0, %s35
    %s52 = sphi 0, %s36
    %s56 = sphi 0, %s56
    %s58 = sphi 0, %s56
    %s59 = sphi 0, %s58
    %s73 = sphi 0, %s59
    %s81 = sphi 0, %s83
    %s84 = sphi 0, %s81
    %s85 = sphi 0, %s84
    %s101 = sphi 0, %s85
  $region4: #{_forward.1} parent=0 // loop_header_branch
    %11 = sbr.rel (%p9) target = $region8
  $region5: #{_forward.1} parent=0 // loop_body
    %s13 = ssub.s32 %s8, 1
    %s14 = ssub.s32 %s8, 2
    %s21 = sadd.s32 1, %s16
    %p22 = scmp.ge.s32.totalorder %s21, 4
    %s23 = scalar_select %p22, 0, %s21
    %s24 = sadd.s32 1, %s15
    %s25 = scalar_select %p22, %s24, %s15
    %p26 = scmp.ge.s32.totalorder %s25, 1
    %s27 = scalar_select %p26, 0, %s25
    %s28 = ssub.s32 %s15, %s27
    %s29 = ssub.s32 %s16, %s23
    %s30 = sor.u32 %s28, %s29
    %p31 = scmp.eq.s32.totalorder %s30, 0
    %s33 = sadd.s32 %s32, 1
    %s34 = scalar_select %p31, %s32, %s33
    %p37 = pneg %p31
    %p38 = scmp.eq.s32.totalorder %s8, 3
    %p39 = por %p37, %p38
    %p40 = scmp.ne.s32.totalorder %s32, %s35
    %p41 = scmp.eq.s32.totalorder %s8, 0
    %p42 = por %p40, %p41
    %p43 = scmp.ne.s32.totalorder %s32, %s35
    %p44 = scmp.eq.s32.totalorder %s13, 3
    %p45 = por %p43, %p44
    %p46 = scmp.ne.s32.totalorder %s35, %s36
    %p47 = scmp.eq.s32.totalorder %s13, 0
    %p48 = por %p46, %p47
    %p49 = scmp.ne.s32.totalorder %s35, %s36
    %p50 = scmp.eq.s32.totalorder %s14, 3
    %p51 = por %p49, %p50
    %p53 = scmp.ne.s32.totalorder %s36, %s52
    %p54 = scmp.eq.s32.totalorder %s14, 0
    %p55 = por %p53, %p54
    %s57 = sadd.s32 %s56, 1
    %p60 = scmp.eq.s32.totalorder %s8, 3
    %p61 = scmp.ne.s32.totalorder %s56, %s58
    %p62 = scmp.eq.s32.totalorder %s8, 0
    %p63 = por %p61, %p62
    %p64 = scmp.ne.s32.totalorder %s56, %s58
    %p65 = scmp.eq.s32.totalorder %s13, 3
    %p66 = por %p64, %p65
    %p67 = scmp.ne.s32.totalorder %s58, %s59
    %p68 = scmp.eq.s32.totalorder %s13, 0
    %p69 = por %p67, %p68
    %p70 = scmp.ne.s32.totalorder %s58, %s59
    %p71 = scmp.eq.s32.totalorder %s14, 3
    %p72 = por %p70, %p71
    %p74 = scmp.ne.s32.totalorder %s59, %s73
    %p75 = scmp.eq.s32.totalorder %s14, 0
    %p76 = por %p74, %p75
    %s77 = ssub.s32 %s15, %s27
    %s78 = ssub.s32 %s16, %s23
    %s79 = sor.u32 %s77, %s78
    %p80 = scmp.eq.s32.totalorder %s79, 0
    %s82 = sadd.s32 %s81, 1
    %s83 = scalar_select %p80, %s81, %s82
    %p86 = pneg %p80
    %p87 = scmp.eq.s32.totalorder %s8, 3
    %p88 = por %p86, %p87
    %p89 = scmp.ne.s32.totalorder %s81, %s84
    %p90 = scmp.eq.s32.totalorder %s8, 0
    %p91 = por %p89, %p90
    %p92 = scmp.ne.s32.totalorder %s81, %s84
    %p93 = scmp.eq.s32.totalorder %s13, 3
    %p94 = por %p92, %p93
    %p95 = scmp.ne.s32.totalorder %s84, %s85
    %p96 = scmp.eq.s32.totalorder %s13, 0
    %p97 = por %p95, %p96
    %p98 = scmp.ne.s32.totalorder %s84, %s85
    %p99 = scmp.eq.s32.totalorder %s14, 3
    %p100 = por %p98, %p99
    %p102 = scmp.ne.s32.totalorder %s85, %s101
    %p103 = scmp.eq.s32.totalorder %s14, 0
    %p104 = por %p102, %p103
    %p105 = scmp.le.s32.totalorder 1, %s8
    %p106 = scmp.lt.s32.totalorder %s8, 5
    %p107 = pnand %p105, %p106
    %p108 = pneg %p107
    // Predicated region
    $region9: #{_forward.1} parent=5 // pred_check
      _
    $region10: #{_forward.1} parent=5 // pred_check_branch
      %110 = sbr.rel (%p107) target = $region12
    $region11: #{_forward.1} parent=5 // pred_region
      %s111 = ssub.s32 %s8, 1
      // Predicated region
      $region13: #{_forward.1} parent=11 // pred_check
        %p112 = pneg %p69
      $region14: #{_forward.1} parent=11 // pred_check_branch
        %114 = sbr.rel (%p112) target = $region16
      $region15: #{_forward.1} parent=11 // pred_region
        _
      $region16: #{_forward.1} parent=11 // pred_fallthru
        _
    $region12: #{_forward.1} parent=5 // pred_fallthru
      _
    %p115 = scmp.lt.s32.totalorder %s8, 4
    // Predicated region
    $region17: #{_forward.1} parent=5 // pred_check
      %p116 = pneg %p115
    $region18: #{_forward.1} parent=5 // pred_check_branch
      %118 = sbr.rel (%p116) target = $region20
    $region19: #{_forward.1} parent=5 // pred_region
      // Predicated region
      $region21: #{_forward.1} parent=19 // pred_check
        %p119 = pneg %p42
      $region22: #{_forward.1} parent=19 // pred_check_branch
        %121 = sbr.rel (%p119) target = $region24
      $region23: #{_forward.1} parent=19 // pred_region
        %s122 = smul.u32 8, %s16
        %p123 = scmp.lt.s32.totalorder %s15, 0
        %s124 = scalar_select %p123, %s15, 0
        %p125 = scmp.lt.s32.totalorder %s122, 31
        %s126 = scalar_select %p125, %s122, 31
        %s127 = smul.addr %s124, 32
        %s128 = sadd.s32 %s126, %s127
        %s129 = smul.addr %s128, 4
        %s130 = scalar_lea.vmem %s0, %s129
        %s131 = smul.u32 8, %s16
      $region24: #{_forward.1} parent=19 // pred_fallthru
        _
    $region20: #{_forward.1} parent=5 // pred_fallthru
      _
    %p132 = scmp.le.s32.totalorder 1, %s8
    %p133 = scmp.lt.s32.totalorder %s8, 5
    %p134 = pnand %p132, %p133
    %p135 = pneg %p134
    // Predicated region
    $region25: #{_forward.1} parent=5 // pred_check
      _
    $region26: #{_forward.1} parent=5 // pred_check_branch
      %137 = sbr.rel (%p134) target = $region28
    $region27: #{_forward.1} parent=5 // pred_region
      %s138 = ssub.s32 %s8, 1
      %s139 = smul.u32 8, %s18
      %p140 = scmp.lt.s32.totalorder %s17, 0
      %s141 = scalar_select %p140, %s17, 0
      %p142 = scmp.lt.s32.totalorder %s139, 31
      %s143 = scalar_select %p142, %s139, 31
      %s144 = smul.addr %s141, 32
      %s145 = sadd.s32 %s143, %s144
      %s146 = smul.addr %s145, 4
      %s147 = scalar_lea.vmem %s0, %s146
      %p148 = pneg %p48
      %p149 = pneg %p45
      %p150 = pneg %p69
      %p151 = pneg %p66
      %p152 = pneg %p97
      %p153 = pneg %p94
      %s154 = smul.u32 8, %s18
      %p155 = scmp.lt.s32.totalorder %s17, 0
      %s156 = scalar_select %p155, %s17, 0
      %p157 = scmp.lt.s32.totalorder %s154, 31
      %s158 = scalar_select %p157, %s154, 31
      %s159 = smul.addr %s156, 32
      %s160 = sadd.s32 %s158, %s159
      %s161 = smul.addr %s160, 8
      %s162 = scalar_lea.vmem %s2, %s161
      %s163 = smul.u32 8, %s18
      %p164 = scmp.lt.s32.totalorder %s17, 0
      %s165 = scalar_select %p164, %s17, 0
      %p166 = scmp.lt.s32.totalorder %s163, 31
      %s167 = scalar_select %p166, %s163, 31
      %s168 = smul.addr %s165, 32
      %s169 = sadd.s32 %s167, %s168
      %s170 = smul.addr %s169, 4
      %s171 = scalar_lea.vmem %s0, %s170
      %s172 = smul.u32 8, %s18
      %s173 = smul.u32 8, %s18
      %p174 = scmp.lt.s32.totalorder %s17, 0
      %s175 = scalar_select %p174, %s17, 0
      %p176 = scmp.lt.s32.totalorder %s173, 31
      %s177 = scalar_select %p176, %s173, 31
      %s178 = smul.addr %s175, 32
      %s179 = sadd.s32 %s177, %s178
      %s180 = smul.addr %s179, 8
      %s181 = scalar_lea.vmem %s2, %s180
      %s182 = smul.u32 8, %s18
      %v183 = vld [vmem:[%s1] sm:$0x3f]
      %v184 = vld [vmem:[%s171] sm:$0x77]
      %v185 = vld [vmem:[%s171 + $0x8] sm:$0x77]
      %v186 = vld [vmem:[%s171 + $0x10] sm:$0x77]
      %v187 = vld [vmem:[%s171 + $0x18] sm:$0x77]
      %v192 = vcombine.high %v184, %v184
      %v193 = vcombine.high %v185, %v185
      %v194 = vcombine.high %v186, %v186
      %v195 = vcombine.high %v187, %v187
      %vm196 = vcmask 23552
      %v198 = vsel %vm196, %v183, 0
      %vm200 = vcmask 1042432
      %v201 = vsel %vm200, %v184, 0
      %v203 = vsel %vm200, %v192, 0
      %v205 = vsel %vm200, %v185, 0
      %v207 = vsel %vm200, %v193, 0
      %v209 = vsel %vm200, %v186, 0
      %v211 = vsel %vm200, %v194, 0
      %v213 = vsel %vm200, %v187, 0
      %v215 = vsel %vm200, %v195, 0
      %217 = vmatprep.subr.mxu0 %v203
      %218 = vmatpush1.msra.mxu0 %v201
      %219 = vmatprep.subr.mxu0 0.0
      %220 = vmatpush1.msra.mxu0 0.0
      %221 = vmatprep.subr.mxu0 0.0
      %222 = vmatpush1.msra.mxu0 0.0
      %223 = vmatprep.subr.mxu0 0.0
      %224 = vmatpush1.msra.mxu0 0.0
      %225 = vmatprep.subr.mxu0 0.0
      %226 = vmatpush1.msra.mxu0 0.0
      %227 = vmatprep.subr.mxu0 0.0
      %228 = vmatpush1.msra.mxu0 0.0
      %229 = vmatprep.subr.mxu0 0.0
      %230 = vmatpush1.msra.mxu0 0.0
      %231 = vmatprep.subr.mxu0 0.0
      %232 = vmatpush1.msra.mxu0 0.0
      %233 = vmatprep.subr.mxu0 0.0
      %234 = vmatpush1.msra.mxu0 0.0
      %235 = vmatprep.subr.mxu0 0.0
      %236 = vmatpush1.msra.mxu0 0.0
      %237 = vmatprep.subr.mxu0 0.0
      %238 = vmatpush1.msra.mxu0 0.0
      %239 = vmatprep.subr.mxu0 0.0
      %240 = vmatpush1.msra.mxu0 0.0
      %241 = vmatprep.subr.mxu0 0.0
      %242 = vmatpush1.msra.mxu0 0.0
      %243 = vmatprep.subr.mxu0 0.0
      %244 = vmatpush1.msra.mxu0 0.0
      %245 = vmatprep.subr.mxu0 0.0
      %246 = vmatpush1.msra.mxu0 0.0
      %247 = vmatprep.subr.mxu0 0.0
      %248 = vmatpush1.msra.mxu0 0.0
      %249 = vmatprep.subr.mxu0 0.0
      %250 = vmatpush1.msra.mxu0 0.0
      %251 = vmatprep.subr.mxu0 0.0
      %252 = vmatpush1.msra.mxu0 0.0
      %253 = vmatprep.subr.mxu0 0.0
      %254 = vmatpush1.msra.mxu0 0.0
      %255 = vmatprep.subr.mxu0 0.0
      %256 = vmatpush1.msra.mxu0 0.0
      %257 = vmatprep.subr.mxu0 0.0
      %258 = vmatpush1.msra.mxu0 0.0
      %259 = vmatprep.subr.mxu0 0.0
      %260 = vmatpush1.msra.mxu0 0.0
      %261 = vmatprep.subr.mxu0 0.0
      %262 = vmatpush1.msra.mxu0 0.0
      %263 = vmatprep.subr.mxu0 0.0
      %264 = vmatpush1.msra.mxu0 0.0
      %265 = vmatprep.subr.mxu0 0.0
      %266 = vmatpush1.msra.mxu0 0.0
      %267 = vmatprep.subr.mxu0 0.0
      %268 = vmatpush1.msra.mxu0 0.0
      %269 = vmatprep.subr.mxu0 0.0
      %270 = vmatpush1.msra.mxu0 0.0
      %271 = vmatprep.subr.mxu0 0.0
      %272 = vmatpush1.msra.mxu0 0.0
      %273 = vmatprep.subr.mxu0 0.0
      %274 = vmatpush1.msra.mxu0 0.0
      %275 = vmatprep.subr.mxu0 0.0
      %276 = vmatpush1.msra.mxu0 0.0
      %277 = vmatprep.subr.mxu0 0.0
      %278 = vmatpush1.msra.mxu0 0.0
      %279 = vmatprep.subr.mxu0 0.0
      %280 = vmatpush1.msra.mxu0 0.0
      %281 = vmatprep.mubr.f32.mxu0 0.0
      %282 = vmatmul.mubr.f32.gmra.mrb[0].mxu0 %v198
      %v283 = vpop.f32.mrb[0].mxu0
      %v284 = vadd.f32 0.0, %v283
      %v285 = vpop.f32.mrb[0].mxu0
      %v286 = vadd.f32 0.0, %v285
      %287 = vdwg.mxu0
      %288 = vmatprep.subr.mxu0 %v207
      %289 = vmatpush1.msra.mxu0 %v205
      %290 = vmatprep.subr.mxu0 0.0
      %291 = vmatpush1.msra.mxu0 0.0
      %292 = vmatprep.subr.mxu0 0.0
      %293 = vmatpush1.msra.mxu0 0.0
      %294 = vmatprep.subr.mxu0 0.0
      %295 = vmatpush1.msra.mxu0 0.0
      %296 = vmatprep.subr.mxu0 0.0
      %297 = vmatpush1.msra.mxu0 0.0
      %298 = vmatprep.subr.mxu0 0.0
      %299 = vmatpush1.msra.mxu0 0.0
      %300 = vmatprep.subr.mxu0 0.0
      %301 = vmatpush1.msra.mxu0 0.0
      %302 = vmatprep.subr.mxu0 0.0
      %303 = vmatpush1.msra.mxu0 0.0
      %304 = vmatprep.subr.mxu0 0.0
      %305 = vmatpush1.msra.mxu0 0.0
      %306 = vmatprep.subr.mxu0 0.0
      %307 = vmatpush1.msra.mxu0 0.0
      %308 = vmatprep.subr.mxu0 0.0
      %309 = vmatpush1.msra.mxu0 0.0
      %310 = vmatprep.subr.mxu0 0.0
      %311 = vmatpush1.msra.mxu0 0.0
      %312 = vmatprep.subr.mxu0 0.0
      %313 = vmatpush1.msra.mxu0 0.0
      %314 = vmatprep.subr.mxu0 0.0
      %315 = vmatpush1.msra.mxu0 0.0
      %316 = vmatprep.subr.mxu0 0.0
      %317 = vmatpush1.msra.mxu0 0.0
      %318 = vmatprep.subr.mxu0 0.0
      %319 = vmatpush1.msra.mxu0 0.0
      %320 = vmatprep.subr.mxu0 0.0
      %321 = vmatpush1.msra.mxu0 0.0
      %322 = vmatprep.subr.mxu0 0.0
      %323 = vmatpush1.msra.mxu0 0.0
      %324 = vmatprep.subr.mxu0 0.0
      %325 = vmatpush1.msra.mxu0 0.0
      %326 = vmatprep.subr.mxu0 0.0
      %327 = vmatpush1.msra.mxu0 0.0
      %328 = vmatprep.subr.mxu0 0.0
      %329 = vmatpush1.msra.mxu0 0.0
      %330 = vmatprep.subr.mxu0 0.0
      %331 = vmatpush1.msra.mxu0 0.0
      %332 = vmatprep.subr.mxu0 0.0
      %333 = vmatpush1.msra.mxu0 0.0
      %334 = vmatprep.subr.mxu0 0.0
      %335 = vmatpush1.msra.mxu0 0.0
      %336 = vmatprep.subr.mxu0 0.0
      %337 = vmatpush1.msra.mxu0 0.0
      %338 = vmatprep.subr.mxu0 0.0
      %339 = vmatpush1.msra.mxu0 0.0
      %340 = vmatprep.subr.mxu0 0.0
      %341 = vmatpush1.msra.mxu0 0.0
      %342 = vmatprep.subr.mxu0 0.0
      %343 = vmatpush1.msra.mxu0 0.0
      %344 = vmatprep.subr.mxu0 0.0
      %345 = vmatpush1.msra.mxu0 0.0
      %346 = vmatprep.subr.mxu0 0.0
      %347 = vmatpush1.msra.mxu0 0.0
      %348 = vmatprep.subr.mxu0 0.0
      %349 = vmatpush1.msra.mxu0 0.0
      %350 = vmatprep.subr.mxu0 0.0
      %351 = vmatpush1.msra.mxu0 0.0
      %352 = vmatprep.mubr.f32.mxu0 0.0
      %353 = vmatmul.mubr.f32.gmra.mrb[0].mxu0 %v198
      %v354 = vpop.f32.mrb[0].mxu0
      %v355 = vadd.f32 0.0, %v354
      %v356 = vpop.f32.mrb[0].mxu0
      %v357 = vadd.f32 0.0, %v356
      %358 = vdwg.mxu0
      %359 = vmatprep.subr.mxu0 %v211
      %360 = vmatpush1.msra.mxu0 %v209
      %361 = vmatprep.subr.mxu0 0.0
      %362 = vmatpush1.msra.mxu0 0.0
      %363 = vmatprep.subr.mxu0 0.0
      %364 = vmatpush1.msra.mxu0 0.0
      %365 = vmatprep.subr.mxu0 0.0
      %366 = vmatpush1.msra.mxu0 0.0
      %367 = vmatprep.subr.mxu0 0.0
      %368 = vmatpush1.msra.mxu0 0.0
      %369 = vmatprep.subr.mxu0 0.0
      %370 = vmatpush1.msra.mxu0 0.0
      %371 = vmatprep.subr.mxu0 0.0
      %372 = vmatpush1.msra.mxu0 0.0
      %373 = vmatprep.subr.mxu0 0.0
      %374 = vmatpush1.msra.mxu0 0.0
      %375 = vmatprep.subr.mxu0 0.0
      %376 = vmatpush1.msra.mxu0 0.0
      %377 = vmatprep.subr.mxu0 0.0
      %378 = vmatpush1.msra.mxu0 0.0
      %379 = vmatprep.subr.mxu0 0.0
      %380 = vmatpush1.msra.mxu0 0.0
      %381 = vmatprep.subr.mxu0 0.0
      %382 = vmatpush1.msra.mxu0 0.0
      %383 = vmatprep.subr.mxu0 0.0
      %384 = vmatpush1.msra.mxu0 0.0
      %385 = vmatprep.subr.mxu0 0.0
      %386 = vmatpush1.msra.mxu0 0.0
      %387 = vmatprep.subr.mxu0 0.0
      %388 = vmatpush1.msra.mxu0 0.0
      %389 = vmatprep.subr.mxu0 0.0
      %390 = vmatpush1.msra.mxu0 0.0
      %391 = vmatprep.subr.mxu0 0.0
      %392 = vmatpush1.msra.mxu0 0.0
      %393 = vmatprep.subr.mxu0 0.0
      %394 = vmatpush1.msra.mxu0 0.0
      %395 = vmatprep.subr.mxu0 0.0
      %396 = vmatpush1.msra.mxu0 0.0
      %397 = vmatprep.subr.mxu0 0.0
      %398 = vmatpush1.msra.mxu0 0.0
      %399 = vmatprep.subr.mxu0 0.0
      %400 = vmatpush1.msra.mxu0 0.0
      %401 = vmatprep.subr.mxu0 0.0
      %402 = vmatpush1.msra.mxu0 0.0
      %403 = vmatprep.subr.mxu0 0.0
      %404 = vmatpush1.msra.mxu0 0.0
      %405 = vmatprep.subr.mxu0 0.0
      %406 = vmatpush1.msra.mxu0 0.0
      %407 = vmatprep.subr.mxu0 0.0
      %408 = vmatpush1.msra.mxu0 0.0
      %409 = vmatprep.subr.mxu0 0.0
      %410 = vmatpush1.msra.mxu0 0.0
      %411 = vmatprep.subr.mxu0 0.0
      %412 = vmatpush1.msra.mxu0 0.0
      %413 = vmatprep.subr.mxu0 0.0
      %414 = vmatpush1.msra.mxu0 0.0
      %415 = vmatprep.subr.mxu0 0.0
      %416 = vmatpush1.msra.mxu0 0.0
      %417 = vmatprep.subr.mxu0 0.0
      %418 = vmatpush1.msra.mxu0 0.0
      %419 = vmatprep.subr.mxu0 0.0
      %420 = vmatpush1.msra.mxu0 0.0
      %421 = vmatprep.subr.mxu0 0.0
      %422 = vmatpush1.msra.mxu0 0.0
      %423 = vmatprep.mubr.f32.mxu0 0.0
      %424 = vmatmul.mubr.f32.gmra.mrb[0].mxu0 %v198
      %v425 = vpop.f32.mrb[0].mxu0
      %v426 = vadd.f32 0.0, %v425
      %v427 = vpop.f32.mrb[0].mxu0
      %v428 = vadd.f32 0.0, %v427
      %429 = vdwg.mxu0
      %430 = vmatprep.subr.mxu0 %v215
      %431 = vmatpush1.msra.mxu0 %v213
      %432 = vmatprep.subr.mxu0 0.0
      %433 = vmatpush1.msra.mxu0 0.0
      %434 = vmatprep.subr.mxu0 0.0
      %435 = vmatpush1.msra.mxu0 0.0
      %436 = vmatprep.subr.mxu0 0.0
      %437 = vmatpush1.msra.mxu0 0.0
      %438 = vmatprep.subr.mxu0 0.0
      %439 = vmatpush1.msra.mxu0 0.0
      %440 = vmatprep.subr.mxu0 0.0
      %441 = vmatpush1.msra.mxu0 0.0
      %442 = vmatprep.subr.mxu0 0.0
      %443 = vmatpush1.msra.mxu0 0.0
      %444 = vmatprep.subr.mxu0 0.0
      %445 = vmatpush1.msra.mxu0 0.0
      %446 = vmatprep.subr.mxu0 0.0
      %447 = vmatpush1.msra.mxu0 0.0
      %448 = vmatprep.subr.mxu0 0.0
      %449 = vmatpush1.msra.mxu0 0.0
      %450 = vmatprep.subr.mxu0 0.0
      %451 = vmatpush1.msra.mxu0 0.0
      %452 = vmatprep.subr.mxu0 0.0
      %453 = vmatpush1.msra.mxu0 0.0
      %454 = vmatprep.subr.mxu0 0.0
      %455 = vmatpush1.msra.mxu0 0.0
      %456 = vmatprep.subr.mxu0 0.0
      %457 = vmatpush1.msra.mxu0 0.0
      %458 = vmatprep.subr.mxu0 0.0
      %459 = vmatpush1.msra.mxu0 0.0
      %460 = vmatprep.subr.mxu0 0.0
      %461 = vmatpush1.msra.mxu0 0.0
      %462 = vmatprep.subr.mxu0 0.0
      %463 = vmatpush1.msra.mxu0 0.0
      %464 = vmatprep.subr.mxu0 0.0
      %465 = vmatpush1.msra.mxu0 0.0
      %466 = vmatprep.subr.mxu0 0.0
      %467 = vmatpush1.msra.mxu0 0.0
      %468 = vmatprep.subr.mxu0 0.0
      %469 = vmatpush1.msra.mxu0 0.0
      %470 = vmatprep.subr.mxu0 0.0
      %471 = vmatpush1.msra.mxu0 0.0
      %472 = vmatprep.subr.mxu0 0.0
      %473 = vmatpush1.msra.mxu0 0.0
      %474 = vmatprep.subr.mxu0 0.0
      %475 = vmatpush1.msra.mxu0 0.0
      %476 = vmatprep.subr.mxu0 0.0
      %477 = vmatpush1.msra.mxu0 0.0
      %478 = vmatprep.subr.mxu0 0.0
      %479 = vmatpush1.msra.mxu0 0.0
      %480 = vmatprep.subr.mxu0 0.0
      %481 = vmatpush1.msra.mxu0 0.0
      %482 = vmatprep.subr.mxu0 0.0
      %483 = vmatpush1.msra.mxu0 0.0
      %484 = vmatprep.subr.mxu0 0.0
      %485 = vmatpush1.msra.mxu0 0.0
      %486 = vmatprep.subr.mxu0 0.0
      %487 = vmatpush1.msra.mxu0 0.0
      %488 = vmatprep.subr.mxu0 0.0
      %489 = vmatpush1.msra.mxu0 0.0
      %490 = vmatprep.subr.mxu0 0.0
      %491 = vmatpush1.msra.mxu0 0.0
      %492 = vmatprep.subr.mxu0 0.0
      %493 = vmatpush1.msra.mxu0 0.0
      %494 = vmatprep.mubr.f32.mxu0 0.0
      %495 = vmatmul.mubr.f32.gmra.mrb[0].mxu0 %v198
      %v496 = vpop.f32.mrb[0].mxu0
      %v497 = vadd.f32 0.0, %v496
      %v498 = vpop.f32.mrb[0].mxu0
      %v499 = vadd.f32 0.0, %v498
      %500 = vdwg.mxu0
      %501 = vst [vmem:[%s181] sm:$0x3f] %v284
      %502 = vst [vmem:[%s181 + $0x8] sm:$0x3f] %v286
      %503 = vst [vmem:[%s181 + $0x10] sm:$0x3f] %v355
      %504 = vst [vmem:[%s181 + $0x18] sm:$0x3f] %v357
      %505 = vst [vmem:[%s181 + $0x20] sm:$0x3f] %v426
      %506 = vst [vmem:[%s181 + $0x28] sm:$0x3f] %v428
      %507 = vst [vmem:[%s181 + $0x30] sm:$0x3f] %v497
      %508 = vst [vmem:[%s181 + $0x38] sm:$0x3f] %v499
      %s509 = smul.u32 8, %s18
      %p510 = scmp.lt.s32.totalorder %s17, 0
      %s511 = scalar_select %p510, %s17, 0
      %p512 = scmp.lt.s32.totalorder %s509, 31
      %s513 = scalar_select %p512, %s509, 31
      %s514 = smul.addr %s511, 32
      %s515 = sadd.s32 %s513, %s514
      %s516 = smul.addr %s515, 8
      %s517 = scalar_lea.vmem %s2, %s516
      // Predicated region
      $region29: #{_forward.1} parent=27 // pred_check
        %p518 = pneg %p94
      $region30: #{_forward.1} parent=27 // pred_check_branch
        %520 = sbr.rel (%p518) target = $region32
      $region31: #{_forward.1} parent=27 // pred_region
        %s521 = smul.u32 8, %s18
      $region32: #{_forward.1} parent=27 // pred_fallthru
        _
    $region28: #{_forward.1} parent=5 // pred_fallthru
      _
    %p522 = scmp.le.s32.totalorder 2, %s8
    // Predicated region
    $region33: #{_forward.1} parent=5 // pred_check
      %p523 = pneg %p522
    $region34: #{_forward.1} parent=5 // pred_check_branch
      %525 = sbr.rel (%p523) target = $region36
    $region35: #{_forward.1} parent=5 // pred_region
      %s526 = ssub.s32 %s8, 2
      // Predicated region
      $region37: #{_forward.1} parent=35 // pred_check
        %p527 = pneg %p100
      $region38: #{_forward.1} parent=35 // pred_check_branch
        %529 = sbr.rel (%p527) target = $region40
      $region39: #{_forward.1} parent=35 // pred_region
        %s530 = smul.u32 8, %s20
        %p531 = scmp.lt.s32.totalorder %s19, 0
        %s532 = scalar_select %p531, %s19, 0
        %p533 = scmp.lt.s32.totalorder %s530, 31
        %s534 = scalar_select %p533, %s530, 31
        %s535 = smul.addr %s532, 32
        %s536 = sadd.s32 %s534, %s535
        %s537 = smul.addr %s536, 8
        %s538 = scalar_lea.vmem %s2, %s537
      $region40: #{_forward.1} parent=35 // pred_fallthru
        _
    $region36: #{_forward.1} parent=5 // pred_fallthru
      _
  $region6: #{_forward.1} parent=0 // loop_footer
    %s12 = sadd.s32 1, %s8
  $region7: #{_forward.1} parent=0 // loop_footer_branch
    %7 = sbr.rel target = $region3
  $region8: #{_forward.1} parent=0 // loop_exit
    _

</llo_original>
